<compile_context>
chip_gen: v7x
topology: tpu7x:2x2x1
jax: 0.10.0
libtpu: 0.0.40
codegen_flags: <defaults>
</compile_context>

<pallas_src>
import jax
import jax.numpy as jnp
from jax.experimental import pallas as pl
from jax.experimental.pallas import tpu as pltpu

INPUT_SIZE = 784
NUMBER_H = 3          # number of hidden Linear+ReLU blocks (matches the module)
HIDDEN = 32
NUM_CLASSES = 10

LANE = 128
H_PAD = 128           # round_up(32, 128)  (hidden width padded to one lane group)
C_PAD = 128           # round_up(10, 128)  (output width padded to one lane group)

TILE_M_CAP = 1024     # keeps x tile (f32) + double buffering under ~8 MB VMEM


def _round_up(a, b):
    return (a + b - 1) // b * b


def _cdiv(a, b):
    return (a + b - 1) // b


# --------------------------------------------------------------------------- #
# Fused kernel: whole MLP in one pallas_call, weights resident in VMEM.
# --------------------------------------------------------------------------- #
def _mlp_kernel(x_ref, w0_ref, b0_ref, w1_ref, b1_ref, w2_ref, b2_ref,
                w3_ref, b3_ref, wo_ref, bo_ref, o_ref):
    # In-kernel bf16 cast of the f32 input tile (hidden under the DMA slack).
    x = x_ref[...].astype(jnp.bfloat16)
    # Layer 0: Linear(784 -> 32) + ReLU  (output width padded to 128 lanes)
    h = jnp.dot(x, w0_ref[...], preferred_element_type=jnp.float32)
    h = jnp.maximum(h + b0_ref[...], 0.0)
    # 3 hidden layers: Linear(32 -> 32) + ReLU  (padded to 128x128 slabs)
    for w_ref, b_ref in ((w1_ref, b1_ref), (w2_ref, b2_ref), (w3_ref, b3_ref)):
        h = jnp.dot(h.astype(jnp.bfloat16), w_ref[...],
                    preferred_element_type=jnp.float32)
        h = jnp.maximum(h + b_ref[...], 0.0)
    # Output layer: Linear(32 -> 10), no activation (logits)
    out = jnp.dot(h.astype(jnp.bfloat16), wo_ref[...],
                  preferred_element_type=jnp.float32)
    o_ref[...] = (out + bo_ref[...]).astype(o_ref.dtype)


# --------------------------------------------------------------------------- #
# Parameter init (mimics torch.nn.Linear default: U(-1/sqrt(in), 1/sqrt(in)))
# --------------------------------------------------------------------------- #
def init_linear_params(key, in_features, out_features):
    kw, kb = jax.random.split(key)
    bound = 1.0 / jnp.sqrt(jnp.float32(in_features))
    # stored as [in, out] (transposed relative to PyTorch's [out, in])
    w = jax.random.uniform(kw, (in_features, out_features), jnp.float32,
                           minval=-bound, maxval=bound)
    b = jax.random.uniform(kb, (out_features,), jnp.float32,
                           minval=-bound, maxval=bound)
    return w, b


def init_mlp_params(key, input_size=INPUT_SIZE, hidden=HIDDEN,
                    num_classes=NUM_CLASSES):
    keys = jax.random.split(key, 2 + NUMBER_H)
    return {
        "linear": init_linear_params(keys[0], input_size, hidden),
        "linearH": [init_linear_params(keys[1 + i], hidden, hidden)
                    for i in range(NUMBER_H)],
        "out": init_linear_params(keys[1 + NUMBER_H], hidden, num_classes),
    }


def _pad2(a, rows, cols):
    # NOTE: padding MUST be zeros — the zero rows/cols are what keep the padded
    # 128-lane math identical to the unpadded 784/32/10-wide math.
    r, c = a.shape
    return jnp.pad(a, ((0, rows - r), (0, cols - c)))


def prepare_params(params):
    """Zero-pad feature dims to 128-lane slabs, weights -> bf16, biases -> (1, N) f32.

    Layer-0 weight keeps its real K = 784 rows (x is fed unpadded); only its
    output dim is padded to 128.
    """
    w0, b0 = params["linear"]
    prepped = [
        _pad2(w0, INPUT_SIZE, H_PAD).astype(jnp.bfloat16),        # (784, 128)
        _pad2(b0.reshape(1, -1), 1, H_PAD).astype(jnp.float32),   # (1, 128)
    ]
    for wh, bh in params["linearH"]:
        prepped.append(_pad2(wh, H_PAD, H_PAD).astype(jnp.bfloat16))        # (128, 128)
        prepped.append(_pad2(bh.reshape(1, -1), 1, H_PAD).astype(jnp.float32))
    wo, bo = params["out"]
    prepped.append(_pad2(wo, H_PAD, C_PAD).astype(jnp.bfloat16))            # (128, 128)
    prepped.append(_pad2(bo.reshape(1, -1), 1, C_PAD).astype(jnp.float32))  # (1, 128)
    return tuple(prepped)


def _choose_tiles(M, cap=TILE_M_CAP):
    """Batch tiling.

    * >= 2 grid steps for any non-trivial M so the single "parallel" axis can
      shard across both v7x TensorCores (no-op on v5e/v6e).
    * tiles capped at `cap` rows to amortize per-step overhead while staying
      comfortably inside scoped VMEM on every generation.
    * tile_m is a multiple of 8; last-block overrun is < 8 rows of the padded
      grid extent, so padded-work waste is negligible.
    """
    if M <= 8:
        return M, 1          # single block == full array; nothing out of bounds
    n_tiles = max(2, _cdiv(M, cap))
    tile_m = _round_up(_cdiv(M, n_tiles), 8)
    n_tiles = _cdiv(M, tile_m)
    return tile_m, n_tiles


# --------------------------------------------------------------------------- #
# Forward wrapper: one fused pallas_call, x fed directly (no pad / no cast copy).
# --------------------------------------------------------------------------- #
@jax.jit
def feedforward_neural_network_forward(prepped, x):
    M, K = x.shape
    assert K == INPUT_SIZE

    tile_m, n_tiles = _choose_tiles(M)

    # x: tiled over the batch only; last dim = full array dim (784) -> legal and
    # lane-dense enough for the DMA; cast to bf16 happens inside the kernel.
    in_specs = [pl.BlockSpec((tile_m, INPUT_SIZE), lambda i: (i, 0))]
    # weights / biases: full-array blocks with constant index_map -> VMEM-resident,
    # fetched once (block index never changes across the grid).
    for p in prepped:
        in_specs.append(pl.BlockSpec(p.shape, lambda i: (0, 0)))

    out = pl.pallas_call(
        _mlp_kernel,
        out_shape=jax.ShapeDtypeStruct((M, C_PAD), jnp.float32),
        grid=(n_tiles,),
        in_specs=in_specs,
        out_specs=pl.BlockSpec((tile_m, C_PAD), lambda i: (i, 0)),
        compiler_params=pltpu.CompilerParams(
            dimension_semantics=("parallel",)),
    )(x, *prepped)
    # TODO(synk): if a downstream consumer exists, fuse this column slice (and/or
    # a bf16 output dtype) into it instead of materializing it here.
    return out[:, :NUM_CLASSES]


# --------------------------------------------------------------------------- #
# Pure-JAX reference mirroring the kernel math (bf16 operands, f32 accum).
# --------------------------------------------------------------------------- #
def ref_forward(params, x):
    w, b = params["linear"]
    h = jnp.dot(x.astype(jnp.bfloat16), w.astype(jnp.bfloat16),
                preferred_element_type=jnp.float32) + b
    h = jnp.maximum(h, 0.0)
    for wh, bh in params["linearH"]:
        h = jnp.dot(h.astype(jnp.bfloat16), wh.astype(jnp.bfloat16),
                    preferred_element_type=jnp.float32) + bh
        h = jnp.maximum(h, 0.0)
    wo, bo = params["out"]
    return jnp.dot(h.astype(jnp.bfloat16), wo.astype(jnp.bfloat16),
                   preferred_element_type=jnp.float32) + bo


if __name__ == "__main__":
    key = jax.random.PRNGKey(0)
    k_params, k_x1, k_x2 = jax.random.split(key, 3)

    params = init_mlp_params(k_params)
    prepped = prepare_params(params)

    # Small batch (single grid step, block == full batch dim).
    batch = 4
    x = jax.random.normal(k_x1, (batch, INPUT_SIZE), jnp.float32)
    out = jax.block_until_ready(feedforward_neural_network_forward(prepped, x))
    assert out.shape == (batch, NUM_CLASSES) and out.dtype == jnp.float32
    ref = ref_forward(params, x)
    assert jnp.allclose(out, ref, atol=1e-2, rtol=1e-2), (
        f"max abs err = {jnp.max(jnp.abs(out - ref))}")

    # Ragged batch (multi-step grid + partial last block on the batch axis).
    batch2 = 300
    x2 = jax.random.normal(k_x2, (batch2, INPUT_SIZE), jnp.float32)
    out2 = jax.block_until_ready(feedforward_neural_network_forward(prepped, x2))
    assert out2.shape == (batch2, NUM_CLASSES)
    ref2 = ref_forward(params, x2)
    assert jnp.allclose(out2, ref2, atol=1e-2, rtol=1e-2), (
        f"max abs err = {jnp.max(jnp.abs(out2 - ref2))}")

    print("KERNEL_OK")
</pallas_src>

<mosaic_0001>
module attributes {stable_mosaic.version = 11 : i64} {
  func.func @_mlp_kernel(%arg0: i32, %arg1: memref<4x784xf32, #tpu.memory_space<vmem>>, %arg2: memref<784x128xbf16, #tpu.memory_space<vmem>>, %arg3: memref<1x128xf32, #tpu.memory_space<vmem>>, %arg4: memref<128x128xbf16, #tpu.memory_space<vmem>>, %arg5: memref<1x128xf32, #tpu.memory_space<vmem>>, %arg6: memref<128x128xbf16, #tpu.memory_space<vmem>>, %arg7: memref<1x128xf32, #tpu.memory_space<vmem>>, %arg8: memref<128x128xbf16, #tpu.memory_space<vmem>>, %arg9: memref<1x128xf32, #tpu.memory_space<vmem>>, %arg10: memref<128x128xbf16, #tpu.memory_space<vmem>>, %arg11: memref<1x128xf32, #tpu.memory_space<vmem>>, %arg12: memref<4x128xf32, #tpu.memory_space<vmem>>) attributes {dimension_semantics = [#tpu.dimension_semantics<parallel>], iteration_bounds = array<i64: 1>, scalar_prefetch = 0 : i64, scratch_operands = 0 : i64, tpu.core_type = #tpu.core_type<tc>, window_params = [{transform_indices = @transform_0, window_bounds = array<i64: 4, 784>}, {pipeline_mode = #tpu.pipeline_mode<synchronous>, transform_indices = @transform_1, window_bounds = array<i64: 784, 128>}, {pipeline_mode = #tpu.pipeline_mode<synchronous>, transform_indices = @transform_2, window_bounds = array<i64: 1, 128>}, {pipeline_mode = #tpu.pipeline_mode<synchronous>, transform_indices = @transform_3, window_bounds = array<i64: 128, 128>}, {pipeline_mode = #tpu.pipeline_mode<synchronous>, transform_indices = @transform_4, window_bounds = array<i64: 1, 128>}, {pipeline_mode = #tpu.pipeline_mode<synchronous>, transform_indices = @transform_5, window_bounds = array<i64: 128, 128>}, {pipeline_mode = #tpu.pipeline_mode<synchronous>, transform_indices = @transform_6, window_bounds = array<i64: 1, 128>}, {pipeline_mode = #tpu.pipeline_mode<synchronous>, transform_indices = @transform_7, window_bounds = array<i64: 128, 128>}, {pipeline_mode = #tpu.pipeline_mode<synchronous>, transform_indices = @transform_8, window_bounds = array<i64: 1, 128>}, {pipeline_mode = #tpu.pipeline_mode<synchronous>, transform_indices = @transform_9, window_bounds = array<i64: 128, 128>}, {pipeline_mode = #tpu.pipeline_mode<synchronous>, transform_indices = @transform_10, window_bounds = array<i64: 1, 128>}, {transform_indices = @transform_11, window_bounds = array<i64: 4, 128>}]} {
    %c0 = arith.constant 0 : index
    %c0_0 = arith.constant 0 : index
    %0 = vector.load %arg1[%c0, %c0_0] : memref<4x784xf32, #tpu.memory_space<vmem>>, vector<4x784xf32>
    %1 = arith.truncf %0 : vector<4x784xf32> to vector<4x784xbf16>
    %c0_1 = arith.constant 0 : index
    %c0_2 = arith.constant 0 : index
    %2 = vector.load %arg2[%c0_1, %c0_2] : memref<784x128xbf16, #tpu.memory_space<vmem>>, vector<784x128xbf16>
    %cst = arith.constant dense<0.000000e+00> : vector<4x128xf32>
    %3 = tpu.matmul %1, %2, %cst {dimension_numbers = #tpu.dot_dimension_numbers<[1], [0], [0], [1], [0, 0, 1, 1], [], []>} : vector<4x784xbf16>, vector<784x128xbf16>, vector<4x128xf32> -> vector<4x128xf32>
    %c0_3 = arith.constant 0 : index
    %c0_4 = arith.constant 0 : index
    %4 = vector.load %arg3[%c0_3, %c0_4] : memref<1x128xf32, #tpu.memory_space<vmem>>, vector<1x128xf32>
    %5 = vector.broadcast %4 : vector<1x128xf32> to vector<4x128xf32>
    %6 = arith.addf %3, %5 : vector<4x128xf32>
    %cst_5 = arith.constant 0.000000e+00 : f32
    %7 = vector.broadcast %cst_5 : f32 to vector<4x128xf32>
    %8 = arith.maximumf %6, %7 : vector<4x128xf32>
    %9 = arith.truncf %8 : vector<4x128xf32> to vector<4x128xbf16>
    %c0_6 = arith.constant 0 : index
    %c0_7 = arith.constant 0 : index
    %10 = vector.load %arg4[%c0_6, %c0_7] : memref<128x128xbf16, #tpu.memory_space<vmem>>, vector<128x128xbf16>
    %cst_8 = arith.constant dense<0.000000e+00> : vector<4x128xf32>
    %11 = tpu.matmul %9, %10, %cst_8 {dimension_numbers = #tpu.dot_dimension_numbers<[1], [0], [0], [1], [0, 0, 1, 1], [], []>} : vector<4x128xbf16>, vector<128x128xbf16>, vector<4x128xf32> -> vector<4x128xf32>
    %c0_9 = arith.constant 0 : index
    %c0_10 = arith.constant 0 : index
    %12 = vector.load %arg5[%c0_9, %c0_10] : memref<1x128xf32, #tpu.memory_space<vmem>>, vector<1x128xf32>
    %13 = vector.broadcast %12 : vector<1x128xf32> to vector<4x128xf32>
    %14 = arith.addf %11, %13 : vector<4x128xf32>
    %cst_11 = arith.constant 0.000000e+00 : f32
    %15 = vector.broadcast %cst_11 : f32 to vector<4x128xf32>
    %16 = arith.maximumf %14, %15 : vector<4x128xf32>
    %17 = arith.truncf %16 : vector<4x128xf32> to vector<4x128xbf16>
    %c0_12 = arith.constant 0 : index
    %c0_13 = arith.constant 0 : index
    %18 = vector.load %arg6[%c0_12, %c0_13] : memref<128x128xbf16, #tpu.memory_space<vmem>>, vector<128x128xbf16>
    %cst_14 = arith.constant dense<0.000000e+00> : vector<4x128xf32>
    %19 = tpu.matmul %17, %18, %cst_14 {dimension_numbers = #tpu.dot_dimension_numbers<[1], [0], [0], [1], [0, 0, 1, 1], [], []>} : vector<4x128xbf16>, vector<128x128xbf16>, vector<4x128xf32> -> vector<4x128xf32>
    %c0_15 = arith.constant 0 : index
    %c0_16 = arith.constant 0 : index
    %20 = vector.load %arg7[%c0_15, %c0_16] : memref<1x128xf32, #tpu.memory_space<vmem>>, vector<1x128xf32>
    %21 = vector.broadcast %20 : vector<1x128xf32> to vector<4x128xf32>
    %22 = arith.addf %19, %21 : vector<4x128xf32>
    %cst_17 = arith.constant 0.000000e+00 : f32
    %23 = vector.broadcast %cst_17 : f32 to vector<4x128xf32>
    %24 = arith.maximumf %22, %23 : vector<4x128xf32>
    %25 = arith.truncf %24 : vector<4x128xf32> to vector<4x128xbf16>
    %c0_18 = arith.constant 0 : index
    %c0_19 = arith.constant 0 : index
    %26 = vector.load %arg8[%c0_18, %c0_19] : memref<128x128xbf16, #tpu.memory_space<vmem>>, vector<128x128xbf16>
    %cst_20 = arith.constant dense<0.000000e+00> : vector<4x128xf32>
    %27 = tpu.matmul %25, %26, %cst_20 {dimension_numbers = #tpu.dot_dimension_numbers<[1], [0], [0], [1], [0, 0, 1, 1], [], []>} : vector<4x128xbf16>, vector<128x128xbf16>, vector<4x128xf32> -> vector<4x128xf32>
    %c0_21 = arith.constant 0 : index
    %c0_22 = arith.constant 0 : index
    %28 = vector.load %arg9[%c0_21, %c0_22] : memref<1x128xf32, #tpu.memory_space<vmem>>, vector<1x128xf32>
    %29 = vector.broadcast %28 : vector<1x128xf32> to vector<4x128xf32>
    %30 = arith.addf %27, %29 : vector<4x128xf32>
    %cst_23 = arith.constant 0.000000e+00 : f32
    %31 = vector.broadcast %cst_23 : f32 to vector<4x128xf32>
    %32 = arith.maximumf %30, %31 : vector<4x128xf32>
    %33 = arith.truncf %32 : vector<4x128xf32> to vector<4x128xbf16>
    %c0_24 = arith.constant 0 : index
    %c0_25 = arith.constant 0 : index
    %34 = vector.load %arg10[%c0_24, %c0_25] : memref<128x128xbf16, #tpu.memory_space<vmem>>, vector<128x128xbf16>
    %cst_26 = arith.constant dense<0.000000e+00> : vector<4x128xf32>
    %35 = tpu.matmul %33, %34, %cst_26 {dimension_numbers = #tpu.dot_dimension_numbers<[1], [0], [0], [1], [0, 0, 1, 1], [], []>} : vector<4x128xbf16>, vector<128x128xbf16>, vector<4x128xf32> -> vector<4x128xf32>
    %c0_27 = arith.constant 0 : index
    %c0_28 = arith.constant 0 : index
    %36 = vector.load %arg11[%c0_27, %c0_28] : memref<1x128xf32, #tpu.memory_space<vmem>>, vector<1x128xf32>
    %37 = vector.broadcast %36 : vector<1x128xf32> to vector<4x128xf32>
    %38 = arith.addf %35, %37 : vector<4x128xf32>
    %c0_29 = arith.constant 0 : index
    %c0_30 = arith.constant 0 : index
    %39 = vector.load %arg12[%c0_29, %c0_30] : memref<4x128xf32, #tpu.memory_space<vmem>>, vector<4x128xf32>
    tpu.vector_store %arg12[%c0_29, %c0_30], %38 {strides = array<i32>} : memref<4x128xf32, #tpu.memory_space<vmem>>, vector<4x128xf32>,
    return
  }
  func.func @transform_0(%arg0: i32) -> (i32, i32) {
    %c0_i32 = arith.constant 0 : i32
    %c0_i32_0 = arith.constant 0 : i32
    return %arg0, %c0_i32 : i32, i32
  }
  func.func @transform_1(%arg0: i32) -> (i32, i32) {
    %c0_i32 = arith.constant 0 : i32
    %c0_i32_0 = arith.constant 0 : i32
    %c0_i32_1 = arith.constant 0 : i32
    return %c0_i32, %c0_i32_0 : i32, i32
  }
  func.func @transform_2(%arg0: i32) -> (i32, i32) {
    %c0_i32 = arith.constant 0 : i32
    %c0_i32_0 = arith.constant 0 : i32
    %c0_i32_1 = arith.constant 0 : i32
    return %c0_i32, %c0_i32_0 : i32, i32
  }
  func.func @transform_3(%arg0: i32) -> (i32, i32) {
    %c0_i32 = arith.constant 0 : i32
    %c0_i32_0 = arith.constant 0 : i32
    %c0_i32_1 = arith.constant 0 : i32
    return %c0_i32, %c0_i32_0 : i32, i32
  }
  func.func @transform_4(%arg0: i32) -> (i32, i32) {
    %c0_i32 = arith.constant 0 : i32
    %c0_i32_0 = arith.constant 0 : i32
    %c0_i32_1 = arith.constant 0 : i32
    return %c0_i32, %c0_i32_0 : i32, i32
  }
  func.func @transform_5(%arg0: i32) -> (i32, i32) {
    %c0_i32 = arith.constant 0 : i32
    %c0_i32_0 = arith.constant 0 : i32
    %c0_i32_1 = arith.constant 0 : i32
    return %c0_i32, %c0_i32_0 : i32, i32
  }
  func.func @transform_6(%arg0: i32) -> (i32, i32) {
    %c0_i32 = arith.constant 0 : i32
    %c0_i32_0 = arith.constant 0 : i32
    %c0_i32_1 = arith.constant 0 : i32
    return %c0_i32, %c0_i32_0 : i32, i32
  }
  func.func @transform_7(%arg0: i32) -> (i32, i32) {
    %c0_i32 = arith.constant 0 : i32
    %c0_i32_0 = arith.constant 0 : i32
    %c0_i32_1 = arith.constant 0 : i32
    return %c0_i32, %c0_i32_0 : i32, i32
  }
  func.func @transform_8(%arg0: i32) -> (i32, i32) {
    %c0_i32 = arith.constant 0 : i32
    %c0_i32_0 = arith.constant 0 : i32
    %c0_i32_1 = arith.constant 0 : i32
    return %c0_i32, %c0_i32_0 : i32, i32
  }
  func.func @transform_9(%arg0: i32) -> (i32, i32) {
    %c0_i32 = arith.constant 0 : i32
    %c0_i32_0 = arith.constant 0 : i32
    %c0_i32_1 = arith.constant 0 : i32
    return %c0_i32, %c0_i32_0 : i32, i32
  }
  func.func @transform_10(%arg0: i32) -> (i32, i32) {
    %c0_i32 = arith.constant 0 : i32
    %c0_i32_0 = arith.constant 0 : i32
    %c0_i32_1 = arith.constant 0 : i32
    return %c0_i32, %c0_i32_0 : i32, i32
  }
  func.func @transform_11(%arg0: i32) -> (i32, i32) {
    %c0_i32 = arith.constant 0 : i32
    %c0_i32_0 = arith.constant 0 : i32
    return %arg0, %c0_i32 : i32, i32
  }
}

</mosaic_0001>

<llo_original>
// kernel: feedforward_neural_network_forward.1
$region0: #{feedforward_neural_network_forward.1}
  #allocation0 [shape = 'u32[]', space=smem, size = 0x4, offset = 0x4, fixed_abs, tag = 'smem constant byte address 0x4 - core index']
  #allocation1 [shape = 'u32[144,128]{1,0:T(1,128)}', space=vmem, size = 0x12000, scoped, tag = 'internal scratch']
  %s0 = inlined_call_operand.vmem [shape: f32[4,784], index: 0, kind: input, shape index: {}]
  %s1 = inlined_call_operand.hbm [shape: bf16[784,128], index: 1, kind: input, shape index: {}]
  %s2 = inlined_call_operand.vmem [shape: f32[1,128], index: 2, kind: input, shape index: {}]
  %s3 = inlined_call_operand.hbm [shape: bf16[128,128], index: 3, kind: input, shape index: {}]
  %s4 = inlined_call_operand.vmem [shape: f32[1,128], index: 4, kind: input, shape index: {}]
  %s5 = inlined_call_operand.hbm [shape: bf16[128,128], index: 5, kind: input, shape index: {}]
  %s6 = inlined_call_operand.vmem [shape: f32[1,128], index: 6, kind: input, shape index: {}]
  %s7 = inlined_call_operand.hbm [shape: bf16[128,128], index: 7, kind: input, shape index: {}]
  %s8 = inlined_call_operand.vmem [shape: f32[1,128], index: 8, kind: input, shape index: {}]
  %s9 = inlined_call_operand.hbm [shape: bf16[128,128], index: 9, kind: input, shape index: {}]
  %s10 = inlined_call_operand.vmem [shape: f32[1,128], index: 10, kind: input, shape index: {}]
  %s11 = inlined_call_operand.hbm [shape: f32[4,128], index: 11, kind: output, shape index: {}]
  %s12 = sld [smem:[#allocation0]]
  $region74: #{feedforward_neural_network_forward.1} parent=0
    _
  %s14 = ssub.s32 1, %s12
  %s15 = scalar_select 0, %s14, %s12
  $region1: #{feedforward_neural_network_forward.1} parent=0
    #allocation2 [shape = 'u8[200704]{0}', space=vmem, size = 0x31000, scoped, tag = 'input window, operand 1, single buffered']
    #allocation3 [shape = 's32[1]{0}', space=sflag, size = 0x4, scoped, tag = 'scoped memory for feedforward_neural_network_forward.1']
    #allocation4 [shape = 's32[1]{0}', space=sflag, size = 0x4, scoped, tag = 'scoped memory for feedforward_neural_network_forward.1']
    #allocation5 [shape = 'u8[32768]{0}', space=vmem, size = 0x8000, scoped, tag = 'input window, operand 3, single buffered']
    #allocation6 [shape = 's32[1]{0}', space=sflag, size = 0x4, scoped, tag = 'scoped memory for feedforward_neural_network_forward.1']
    #allocation7 [shape = 'u8[32768]{0}', space=vmem, size = 0x8000, scoped, tag = 'input window, operand 5, single buffered']
    #allocation8 [shape = 'u8[32768]{0}', space=vmem, size = 0x8000, scoped, tag = 'input window, operand 7, single buffered']
    #allocation9 [shape = 's32[1]{0}', space=sflag, size = 0x4, scoped, tag = 'scoped memory for feedforward_neural_network_forward.1']
    #allocation10 [shape = 'u8[32768]{0}', space=vmem, size = 0x8000, scoped, tag = 'input window, operand 9, single buffered']
    #allocation11 [shape = 'u8[2048]{0}', space=vmem, size = 0x800, scoped, tag = 'output window, operand 0, single buffered']
    %16 = vsyncpa [#allocation3], 0
    %17 = vsyncpa [#allocation6], 0
    %18 = vsyncpa [#allocation9], 0
    %19 = vsyncpa [#allocation4], 0
    // Predicated region
    $region2: #{feedforward_neural_network_forward.1} parent=1 // pred_check
      _
    $region3: #{feedforward_neural_network_forward.1} parent=1 // pred_check_branch
      %21 = sbr.rel (0) target = $region5
    $region4: #{feedforward_neural_network_forward.1} parent=1 // pred_region
      _
    $region5: #{feedforward_neural_network_forward.1} parent=1 // pred_fallthru
      _
    // Predicated region
    $region6: #{feedforward_neural_network_forward.1} parent=1 // pred_check
      _
    $region7: #{feedforward_neural_network_forward.1} parent=1 // pred_check_branch
      %23 = sbr.rel (0) target = $region9
    $region8: #{feedforward_neural_network_forward.1} parent=1 // pred_region
      %s25 = ssub.s32 6272, 6272
      %26 = vsyncadd [#allocation3], %s25
      %s27 = sshll.u32 [#allocation2], 4
      %s28 = int_to_ptr.vmem [resolvable:$true] %s27
      %33 = dma.hbm_to_vmem [thread:$0]  %s1, 6272, %s28, [#allocation3], 64, 64, 4
    $region9: #{feedforward_neural_network_forward.1} parent=1 // pred_fallthru
      _
    // Predicated region
    $region10: #{feedforward_neural_network_forward.1} parent=1 // pred_check
      _
    $region11: #{feedforward_neural_network_forward.1} parent=1 // pred_check_branch
      %35 = sbr.rel (0) target = $region13
    $region12: #{feedforward_neural_network_forward.1} parent=1 // pred_region
      _
    $region13: #{feedforward_neural_network_forward.1} parent=1 // pred_fallthru
      _
    // Predicated region
    $region14: #{feedforward_neural_network_forward.1} parent=1 // pred_check
      _
    $region15: #{feedforward_neural_network_forward.1} parent=1 // pred_check_branch
      %37 = sbr.rel (0) target = $region17
    $region16: #{feedforward_neural_network_forward.1} parent=1 // pred_region
      %s39 = ssub.s32 1024, 1024
      %40 = vsyncadd [#allocation6], %s39
      %s41 = sshll.u32 [#allocation5], 4
      %s42 = int_to_ptr.vmem [resolvable:$true] %s41
      %47 = dma.hbm_to_vmem [thread:$0]  %s3, 1024, %s42, [#allocation6], 64, 64, 4
    $region17: #{feedforward_neural_network_forward.1} parent=1 // pred_fallthru
      _
    // Predicated region
    $region18: #{feedforward_neural_network_forward.1} parent=1 // pred_check
      _
    $region19: #{feedforward_neural_network_forward.1} parent=1 // pred_check_branch
      %49 = sbr.rel (0) target = $region21
    $region20: #{feedforward_neural_network_forward.1} parent=1 // pred_region
      _
    $region21: #{feedforward_neural_network_forward.1} parent=1 // pred_fallthru
      _
    // Predicated region
    $region22: #{feedforward_neural_network_forward.1} parent=1 // pred_check
      _
    $region23: #{feedforward_neural_network_forward.1} parent=1 // pred_check_branch
      %51 = sbr.rel (0) target = $region25
    $region24: #{feedforward_neural_network_forward.1} parent=1 // pred_region
      %s53 = ssub.s32 1024, 1024
      %54 = vsyncadd [#allocation6], %s53
      %s55 = sshll.u32 [#allocation7], 4
      %s56 = int_to_ptr.vmem [resolvable:$true] %s55
      %61 = dma.hbm_to_vmem [thread:$0]  %s5, 1024, %s56, [#allocation6], 64, 64, 4
    $region25: #{feedforward_neural_network_forward.1} parent=1 // pred_fallthru
      _
    // Predicated region
    $region26: #{feedforward_neural_network_forward.1} parent=1 // pred_check
      _
    $region27: #{feedforward_neural_network_forward.1} parent=1 // pred_check_branch
      %63 = sbr.rel (0) target = $region29
    $region28: #{feedforward_neural_network_forward.1} parent=1 // pred_region
      _
    $region29: #{feedforward_neural_network_forward.1} parent=1 // pred_fallthru
      _
    // Predicated region
    $region30: #{feedforward_neural_network_forward.1} parent=1 // pred_check
      _
    $region31: #{feedforward_neural_network_forward.1} parent=1 // pred_check_branch
      %65 = sbr.rel (0) target = $region33
    $region32: #{feedforward_neural_network_forward.1} parent=1 // pred_region
      %s67 = ssub.s32 1024, 1024
      %68 = vsyncadd [#allocation9], %s67
      %s69 = sshll.u32 [#allocation8], 4
      %s70 = int_to_ptr.vmem [resolvable:$true] %s69
      %75 = dma.hbm_to_vmem [thread:$0]  %s7, 1024, %s70, [#allocation9], 64, 64, 4
    $region33: #{feedforward_neural_network_forward.1} parent=1 // pred_fallthru
      _
    // Predicated region
    $region34: #{feedforward_neural_network_forward.1} parent=1 // pred_check
      _
    $region35: #{feedforward_neural_network_forward.1} parent=1 // pred_check_branch
      %77 = sbr.rel (0) target = $region37
    $region36: #{feedforward_neural_network_forward.1} parent=1 // pred_region
      _
    $region37: #{feedforward_neural_network_forward.1} parent=1 // pred_fallthru
      _
    // Predicated region
    $region38: #{feedforward_neural_network_forward.1} parent=1 // pred_check
      _
    $region39: #{feedforward_neural_network_forward.1} parent=1 // pred_check_branch
      %79 = sbr.rel (0) target = $region41
    $region40: #{feedforward_neural_network_forward.1} parent=1 // pred_region
      %s81 = ssub.s32 1024, 1024
      %82 = vsyncadd [#allocation9], %s81
      %s83 = sshll.u32 [#allocation10], 4
      %s84 = int_to_ptr.vmem [resolvable:$true] %s83
      %89 = dma.hbm_to_vmem [thread:$0]  %s9, 1024, %s84, [#allocation9], 64, 64, 4
    $region41: #{feedforward_neural_network_forward.1} parent=1 // pred_fallthru
      _
    // Predicated region
    $region42: #{feedforward_neural_network_forward.1} parent=1 // pred_check
      _
    $region43: #{feedforward_neural_network_forward.1} parent=1 // pred_check_branch
      %91 = sbr.rel (0) target = $region45
    $region44: #{feedforward_neural_network_forward.1} parent=1 // pred_region
      _
    $region45: #{feedforward_neural_network_forward.1} parent=1 // pred_fallthru
      _
    // Predicated region
    $region46: #{feedforward_neural_network_forward.1} parent=1 // pred_check
      _
    $region47: #{feedforward_neural_network_forward.1} parent=1 // pred_check_branch
      %93 = sbr.rel (0) target = $region49
    $region48: #{feedforward_neural_network_forward.1} parent=1 // pred_region
      %94 = dma.done [#allocation3], 6272
    $region49: #{feedforward_neural_network_forward.1} parent=1 // pred_fallthru
      _
    // Predicated region
    $region50: #{feedforward_neural_network_forward.1} parent=1 // pred_check
      _
    $region51: #{feedforward_neural_network_forward.1} parent=1 // pred_check_branch
      %96 = sbr.rel (0) target = $region53
    $region52: #{feedforward_neural_network_forward.1} parent=1 // pred_region
      %97 = dma.done [#allocation6], 1024
    $region53: #{feedforward_neural_network_forward.1} parent=1 // pred_fallthru
      _
    // Predicated region
    $region54: #{feedforward_neural_network_forward.1} parent=1 // pred_check
      _
    $region55: #{feedforward_neural_network_forward.1} parent=1 // pred_check_branch
      %99 = sbr.rel (0) target = $region57
    $region56: #{feedforward_neural_network_forward.1} parent=1 // pred_region
      %100 = dma.done [#allocation6], 1024
    $region57: #{feedforward_neural_network_forward.1} parent=1 // pred_fallthru
      _
    // Predicated region
    $region58: #{feedforward_neural_network_forward.1} parent=1 // pred_check
      _
    $region59: #{feedforward_neural_network_forward.1} parent=1 // pred_check_branch
      %102 = sbr.rel (0) target = $region61
    $region60: #{feedforward_neural_network_forward.1} parent=1 // pred_region
      %103 = dma.done [#allocation9], 1024
    $region61: #{feedforward_neural_network_forward.1} parent=1 // pred_fallthru
      _
    // Predicated region
    $region62: #{feedforward_neural_network_forward.1} parent=1 // pred_check
      _
    $region63: #{feedforward_neural_network_forward.1} parent=1 // pred_check_branch
      %105 = sbr.rel (0) target = $region65
    $region64: #{feedforward_neural_network_forward.1} parent=1 // pred_region
      %106 = dma.done [#allocation9], 1024
    $region65: #{feedforward_neural_network_forward.1} parent=1 // pred_fallthru
      _
    %v108 = vld [vmem:[%s0] sm:$0xff]
    %v109 = vld [vmem:[%s0 + $0x8] sm:$0xff]
    %v110 = vld [vmem:[%s0 + $0x10] sm:$0xff]
    %v111 = vld [vmem:[%s0 + $0x18] sm:$0xf]
    %v115 = vcombine.high %v108, %v108
    %v116 = vcombine.high %v109, %v109
    %v117 = vcombine.high %v110, %v110
    %v121 = vpack.c.bf16 %v108, %v108
    %v122 = vpack.c.bf16 %v115, %v115
    %v123 = vpack.c.bf16 %v109, %v109
    %v124 = vpack.c.bf16 %v116, %v116
    %v125 = vpack.c.bf16 %v110, %v110
    %v126 = vpack.c.bf16 %v117, %v117
    %v127 = vpack.c.bf16 %v111, %v111
    %v128 = vld [vmem:[#allocation2] sm:$0xf]
    %v129 = vld [vmem:[#allocation2 + $0x4] sm:$0xf]
    %v130 = vld [vmem:[#allocation2 + $0x8] sm:$0xf]
    %v131 = vld [vmem:[#allocation2 + $0xc] sm:$0xf]
    %v132 = vld [vmem:[#allocation2 + $0x10] sm:$0xf]
    %v133 = vld [vmem:[#allocation2 + $0x14] sm:$0xf]
    %v134 = vld [vmem:[#allocation2 + $0x18] sm:$0xf]
    %v135 = vld [vmem:[#allocation2 + $0x1c] sm:$0xf]
    %v136 = vld [vmem:[#allocation2 + $0x20] sm:$0xf]
    %v137 = vld [vmem:[#allocation2 + $0x24] sm:$0xf]
    %v138 = vld [vmem:[#allocation2 + $0x28] sm:$0xf]
    %v139 = vld [vmem:[#allocation2 + $0x2c] sm:$0xf]
    %v140 = vld [vmem:[#allocation2 + $0x30] sm:$0xf]
    %v141 = vld [vmem:[#allocation2 + $0x34] sm:$0xf]
    %v142 = vld [vmem:[#allocation2 + $0x38] sm:$0xf]
    %v143 = vld [vmem:[#allocation2 + $0x3c] sm:$0xf]
    %v144 = vld [vmem:[#allocation2 + $0x40] sm:$0xf]
    %v145 = vld [vmem:[#allocation2 + $0x44] sm:$0xf]
    %v146 = vld [vmem:[#allocation2 + $0x48] sm:$0xf]
    %v147 = vld [vmem:[#allocation2 + $0x4c] sm:$0xf]
    %v148 = vld [vmem:[#allocation2 + $0x50] sm:$0xf]
    %v149 = vld [vmem:[#allocation2 + $0x54] sm:$0xf]
    %v150 = vld [vmem:[#allocation2 + $0x58] sm:$0xf]
    %v151 = vld [vmem:[#allocation2 + $0x5c] sm:$0xf]
    %v152 = vld [vmem:[#allocation2 + $0x60] sm:$0xf]
    %v153 = vld [vmem:[#allocation2 + $0x64] sm:$0xf]
    %v154 = vld [vmem:[#allocation2 + $0x68] sm:$0xf]
    %v155 = vld [vmem:[#allocation2 + $0x6c] sm:$0xf]
    %v156 = vld [vmem:[#allocation2 + $0x70] sm:$0xf]
    %v157 = vld [vmem:[#allocation2 + $0x74] sm:$0xf]
    %v158 = vld [vmem:[#allocation2 + $0x78] sm:$0xf]
    %v159 = vld [vmem:[#allocation2 + $0x7c] sm:$0xf]
    %v160 = vld [vmem:[#allocation2 + $0x80] sm:$0xf]
    %v161 = vld [vmem:[#allocation2 + $0x84] sm:$0xf]
    %v162 = vld [vmem:[#allocation2 + $0x88] sm:$0xf]
    %v163 = vld [vmem:[#allocation2 + $0x8c] sm:$0xf]
    %v164 = vld [vmem:[#allocation2 + $0x90] sm:$0xf]
    %v165 = vld [vmem:[#allocation2 + $0x94] sm:$0xf]
    %v166 = vld [vmem:[#allocation2 + $0x98] sm:$0xf]
    %v167 = vld [vmem:[#allocation2 + $0x9c] sm:$0xf]
    %v168 = vld [vmem:[#allocation2 + $0xa0] sm:$0xf]
    %v169 = vld [vmem:[#allocation2 + $0xa4] sm:$0xf]
    %v170 = vld [vmem:[#allocation2 + $0xa8] sm:$0xf]
    %v171 = vld [vmem:[#allocation2 + $0xac] sm:$0xf]
    %v172 = vld [vmem:[#allocation2 + $0xb0] sm:$0xf]
    %v173 = vld [vmem:[#allocation2 + $0xb4] sm:$0xf]
    %v174 = vld [vmem:[#allocation2 + $0xb8] sm:$0xf]
    %v175 = vld [vmem:[#allocation2 + $0xbc] sm:$0xf]
    %v176 = vld [vmem:[#allocation2 + $0xc0] sm:$0xf]
    %v177 = vld [vmem:[#allocation2 + $0xc4] sm:$0xf]
    %v178 = vld [vmem:[#allocation2 + $0xc8] sm:$0xf]
    %v179 = vld [vmem:[#allocation2 + $0xcc] sm:$0xf]
    %v180 = vld [vmem:[#allocation2 + $0xd0] sm:$0xf]
    %v181 = vld [vmem:[#allocation2 + $0xd4] sm:$0xf]
    %v182 = vld [vmem:[#allocation2 + $0xd8] sm:$0xf]
    %v183 = vld [vmem:[#allocation2 + $0xdc] sm:$0xf]
    %v184 = vld [vmem:[#allocation2 + $0xe0] sm:$0xf]
    %v185 = vld [vmem:[#allocation2 + $0xe4] sm:$0xf]
    %v186 = vld [vmem:[#allocation2 + $0xe8] sm:$0xf]
    %v187 = vld [vmem:[#allocation2 + $0xec] sm:$0xf]
    %v188 = vld [vmem:[#allocation2 + $0xf0] sm:$0xf]
    %v189 = vld [vmem:[#allocation2 + $0xf4] sm:$0xf]
    %v190 = vld [vmem:[#allocation2 + $0xf8] sm:$0xf]
    %v191 = vld [vmem:[#allocation2 + $0xfc] sm:$0xf]
    %v192 = vld [vmem:[#allocation2 + $0x100] sm:$0xf]
    %v193 = vld [vmem:[#allocation2 + $0x104] sm:$0xf]
    %v194 = vld [vmem:[#allocation2 + $0x108] sm:$0xf]
    %v195 = vld [vmem:[#allocation2 + $0x10c] sm:$0xf]
    %v196 = vld [vmem:[#allocation2 + $0x110] sm:$0xf]
    %v197 = vld [vmem:[#allocation2 + $0x114] sm:$0xf]
    %v198 = vld [vmem:[#allocation2 + $0x118] sm:$0xf]
    %v199 = vld [vmem:[#allocation2 + $0x11c] sm:$0xf]
    %v200 = vld [vmem:[#allocation2 + $0x120] sm:$0xf]
    %v201 = vld [vmem:[#allocation2 + $0x124] sm:$0xf]
    %v202 = vld [vmem:[#allocation2 + $0x128] sm:$0xf]
    %v203 = vld [vmem:[#allocation2 + $0x12c] sm:$0xf]
    %v204 = vld [vmem:[#allocation2 + $0x130] sm:$0xf]
    %v205 = vld [vmem:[#allocation2 + $0x134] sm:$0xf]
    %v206 = vld [vmem:[#allocation2 + $0x138] sm:$0xf]
    %v207 = vld [vmem:[#allocation2 + $0x13c] sm:$0xf]
    %v208 = vld [vmem:[#allocation2 + $0x140] sm:$0xf]
    %v209 = vld [vmem:[#allocation2 + $0x144] sm:$0xf]
    %v210 = vld [vmem:[#allocation2 + $0x148] sm:$0xf]
    %v211 = vld [vmem:[#allocation2 + $0x14c] sm:$0xf]
    %v212 = vld [vmem:[#allocation2 + $0x150] sm:$0xf]
    %v213 = vld [vmem:[#allocation2 + $0x154] sm:$0xf]
    %v214 = vld [vmem:[#allocation2 + $0x158] sm:$0xf]
    %v215 = vld [vmem:[#allocation2 + $0x15c] sm:$0xf]
    %v216 = vld [vmem:[#allocation2 + $0x160] sm:$0xf]
    %v217 = vld [vmem:[#allocation2 + $0x164] sm:$0xf]
    %v218 = vld [vmem:[#allocation2 + $0x168] sm:$0xf]
    %v219 = vld [vmem:[#allocation2 + $0x16c] sm:$0xf]
    %v220 = vld [vmem:[#allocation2 + $0x170] sm:$0xf]
    %v221 = vld [vmem:[#allocation2 + $0x174] sm:$0xf]
    %v222 = vld [vmem:[#allocation2 + $0x178] sm:$0xf]
    %v223 = vld [vmem:[#allocation2 + $0x17c] sm:$0xf]
    %v224 = vld [vmem:[#allocation2 + $0x180] sm:$0xf]
    %v225 = vld [vmem:[#allocation2 + $0x184] sm:$0xf]
    %v226 = vld [vmem:[%s2] sm:$0x1]
    %v228 = vlaneseq
    %v229 = vshrl.u32 %v228, 7
    %v230 = vsub.s32 0, %v229
    %v231 = vrot.slane %v226, %v230
    %v331 = vunpack.c.l.b16 %v128
    %v332 = vunpack.c.l.b16 %v129
    %v333 = vunpack.c.l.b16 %v130
    %v334 = vunpack.c.l.b16 %v131
    %v335 = vunpack.c.l.b16 %v132
    %v336 = vunpack.c.l.b16 %v133
    %v337 = vunpack.c.l.b16 %v134
    %v338 = vunpack.c.l.b16 %v135
    %v339 = vunpack.c.l.b16 %v136
    %v340 = vunpack.c.l.b16 %v137
    %v341 = vunpack.c.l.b16 %v138
    %v342 = vunpack.c.l.b16 %v139
    %v343 = vunpack.c.l.b16 %v140
    %v344 = vunpack.c.l.b16 %v141
    %v345 = vunpack.c.l.b16 %v142
    %v346 = vunpack.c.l.b16 %v143
    %v347 = vunpack.c.l.b16 %v144
    %v348 = vunpack.c.l.b16 %v145
    %v349 = vunpack.c.l.b16 %v146
    %v350 = vunpack.c.l.b16 %v147
    %v351 = vunpack.c.l.b16 %v148
    %v352 = vunpack.c.l.b16 %v149
    %v353 = vunpack.c.l.b16 %v150
    %v354 = vunpack.c.l.b16 %v151
    %v355 = vunpack.c.l.b16 %v152
    %v356 = vunpack.c.l.b16 %v153
    %v357 = vunpack.c.l.b16 %v154
    %v358 = vunpack.c.l.b16 %v155
    %v359 = vunpack.c.l.b16 %v156
    %v360 = vunpack.c.l.b16 %v157
    %v361 = vunpack.c.l.b16 %v158
    %v362 = vunpack.c.l.b16 %v159
    %v363 = vunpack.c.l.b16 %v160
    %v364 = vunpack.c.l.b16 %v161
    %v365 = vunpack.c.l.b16 %v162
    %v366 = vunpack.c.l.b16 %v163
    %v367 = vunpack.c.l.b16 %v164
    %v368 = vunpack.c.l.b16 %v165
    %v369 = vunpack.c.l.b16 %v166
    %v370 = vunpack.c.l.b16 %v167
    %v371 = vunpack.c.l.b16 %v168
    %v372 = vunpack.c.l.b16 %v169
    %v373 = vunpack.c.l.b16 %v170
    %v374 = vunpack.c.l.b16 %v171
    %v375 = vunpack.c.l.b16 %v172
    %v376 = vunpack.c.l.b16 %v173
    %v377 = vunpack.c.l.b16 %v174
    %v378 = vunpack.c.l.b16 %v175
    %v379 = vunpack.c.l.b16 %v176
    %v380 = vunpack.c.l.b16 %v177
    %v381 = vunpack.c.l.b16 %v178
    %v382 = vunpack.c.l.b16 %v179
    %v383 = vunpack.c.l.b16 %v180
    %v384 = vunpack.c.l.b16 %v181
    %v385 = vunpack.c.l.b16 %v182
    %v386 = vunpack.c.l.b16 %v183
    %v387 = vunpack.c.l.b16 %v184
    %v388 = vunpack.c.l.b16 %v185
    %v389 = vunpack.c.l.b16 %v186
    %v390 = vunpack.c.l.b16 %v187
    %v391 = vunpack.c.l.b16 %v188
    %v392 = vunpack.c.l.b16 %v189
    %v393 = vunpack.c.l.b16 %v190
    %v394 = vunpack.c.l.b16 %v191
    %v395 = vunpack.c.l.b16 %v192
    %v396 = vunpack.c.l.b16 %v193
    %v397 = vunpack.c.l.b16 %v194
    %v398 = vunpack.c.l.b16 %v195
    %v399 = vunpack.c.l.b16 %v196
    %v400 = vunpack.c.l.b16 %v197
    %v401 = vunpack.c.l.b16 %v198
    %v402 = vunpack.c.l.b16 %v199
    %v403 = vunpack.c.l.b16 %v200
    %v404 = vunpack.c.l.b16 %v201
    %v405 = vunpack.c.l.b16 %v202
    %v406 = vunpack.c.l.b16 %v203
    %v407 = vunpack.c.l.b16 %v204
    %v408 = vunpack.c.l.b16 %v205
    %v409 = vunpack.c.l.b16 %v206
    %v410 = vunpack.c.l.b16 %v207
    %v411 = vunpack.c.l.b16 %v208
    %v412 = vunpack.c.l.b16 %v209
    %v413 = vunpack.c.l.b16 %v210
    %v414 = vunpack.c.l.b16 %v211
    %v415 = vunpack.c.l.b16 %v212
    %v416 = vunpack.c.l.b16 %v213
    %v417 = vunpack.c.l.b16 %v214
    %v418 = vunpack.c.l.b16 %v215
    %v419 = vunpack.c.l.b16 %v216
    %v420 = vunpack.c.l.b16 %v217
    %v421 = vunpack.c.l.b16 %v218
    %v422 = vunpack.c.l.b16 %v219
    %v423 = vunpack.c.l.b16 %v220
    %v424 = vunpack.c.l.b16 %v221
    %v425 = vunpack.c.l.b16 %v222
    %v426 = vunpack.c.l.b16 %v223
    %v427 = vunpack.c.l.b16 %v224
    %v428 = vunpack.c.l.b16 %v225
    %v429 = vpack.c.b16 %v332, %v331
    %v430 = vpack.c.b16 %v334, %v333
    %v431 = vpack.c.b16 %v336, %v335
    %v432 = vpack.c.b16 %v338, %v337
    %v433 = vpack.c.b16 %v340, %v339
    %v434 = vpack.c.b16 %v342, %v341
    %v435 = vpack.c.b16 %v344, %v343
    %v436 = vpack.c.b16 %v346, %v345
    %v437 = vpack.c.b16 %v348, %v347
    %v438 = vpack.c.b16 %v350, %v349
    %v439 = vpack.c.b16 %v352, %v351
    %v440 = vpack.c.b16 %v354, %v353
    %v441 = vpack.c.b16 %v356, %v355
    %v442 = vpack.c.b16 %v358, %v357
    %v443 = vpack.c.b16 %v360, %v359
    %v444 = vpack.c.b16 %v362, %v361
    %v445 = vpack.c.b16 %v364, %v363
    %v446 = vpack.c.b16 %v366, %v365
    %v447 = vpack.c.b16 %v368, %v367
    %v448 = vpack.c.b16 %v370, %v369
    %v449 = vpack.c.b16 %v372, %v371
    %v450 = vpack.c.b16 %v374, %v373
    %v451 = vpack.c.b16 %v376, %v375
    %v452 = vpack.c.b16 %v378, %v377
    %v453 = vpack.c.b16 %v380, %v379
    %v454 = vpack.c.b16 %v382, %v381
    %v455 = vpack.c.b16 %v384, %v383
    %v456 = vpack.c.b16 %v386, %v385
    %v457 = vpack.c.b16 %v388, %v387
    %v458 = vpack.c.b16 %v390, %v389
    %v459 = vpack.c.b16 %v392, %v391
    %v460 = vpack.c.b16 %v394, %v393
    %v461 = vpack.c.b16 %v396, %v395
    %v462 = vpack.c.b16 %v398, %v397
    %v463 = vpack.c.b16 %v400, %v399
    %v464 = vpack.c.b16 %v402, %v401
    %v465 = vpack.c.b16 %v404, %v403
    %v466 = vpack.c.b16 %v406, %v405
    %v467 = vpack.c.b16 %v408, %v407
    %v468 = vpack.c.b16 %v410, %v409
    %v469 = vpack.c.b16 %v412, %v411
    %v470 = vpack.c.b16 %v414, %v413
    %v471 = vpack.c.b16 %v416, %v415
    %v472 = vpack.c.b16 %v418, %v417
    %v473 = vpack.c.b16 %v420, %v419
    %v474 = vpack.c.b16 %v422, %v421
    %v475 = vpack.c.b16 %v424, %v423
    %v476 = vpack.c.b16 %v426, %v425
    %v477 = vpack.c.b16 %v428, %v427
    %vm527 = vcmask 130048
    %v529 = vsel %vm527, %v127, 0
    %531 = vmatprep.subr.bf16.mxu0 0
    %532 = vmatpush1.bf16.msra.mxu0 %v429
    %533 = vmatprep.subr.bf16.mxu0 0
    %534 = vmatpush1.bf16.msra.mxu0 %v430
    %535 = vmatprep.subr.bf16.mxu0 0
    %536 = vmatpush1.bf16.msra.mxu0 %v431
    %537 = vmatprep.subr.bf16.mxu0 0
    %538 = vmatpush1.bf16.msra.mxu0 %v432
    %539 = vmatprep.subr.bf16.mxu0 0
    %540 = vmatpush1.bf16.msra.mxu0 %v433
    %541 = vmatprep.subr.bf16.mxu0 0
    %542 = vmatpush1.bf16.msra.mxu0 %v434
    %543 = vmatprep.subr.bf16.mxu0 0
    %544 = vmatpush1.bf16.msra.mxu0 %v435
    %545 = vmatprep.subr.bf16.mxu0 0
    %546 = vmatpush1.bf16.msra.mxu0 %v436
    %547 = vmatprep.subr.bf16.mxu0 0
    %548 = vmatpush1.bf16.msra.mxu0 %v437
    %549 = vmatprep.subr.bf16.mxu0 0
    %550 = vmatpush1.bf16.msra.mxu0 %v438
    %551 = vmatprep.subr.bf16.mxu0 0
    %552 = vmatpush1.bf16.msra.mxu0 %v439
    %553 = vmatprep.subr.bf16.mxu0 0
    %554 = vmatpush1.bf16.msra.mxu0 %v440
    %555 = vmatprep.subr.bf16.mxu0 0
    %556 = vmatpush1.bf16.msra.mxu0 %v441
    %557 = vmatprep.subr.bf16.mxu0 0
    %558 = vmatpush1.bf16.msra.mxu0 %v442
    %559 = vmatprep.subr.bf16.mxu0 0
    %560 = vmatpush1.bf16.msra.mxu0 %v443
    %561 = vmatprep.subr.bf16.mxu0 0
    %562 = vmatpush1.bf16.msra.mxu0 %v444
    %563 = vmatprep.mubr.bf16.mxu0 %v122
    %564 = vmatmul.mubr.bf16.gmra.mrb[0].mxu0 %v121
    %v565 = vpop.f32.mrb[0].mxu0
    %v566 = vadd.f32 %v231, %v565
    %v567 = vpop.f32.mrb[0].mxu0
    %v568 = vpop.f32.mrb[0].mxu0
    %v569 = vpop.f32.mrb[0].mxu0
    %570 = vdwg.mxu0
    %571 = vmatprep.subr.bf16.mxu0 0
    %572 = vmatpush1.bf16.msra.mxu0 %v445
    %573 = vmatprep.subr.bf16.mxu0 0
    %574 = vmatpush1.bf16.msra.mxu0 %v446
    %575 = vmatprep.subr.bf16.mxu0 0
    %576 = vmatpush1.bf16.msra.mxu0 %v447
    %577 = vmatprep.subr.bf16.mxu0 0
    %578 = vmatpush1.bf16.msra.mxu0 %v448
    %579 = vmatprep.subr.bf16.mxu0 0
    %580 = vmatpush1.bf16.msra.mxu0 %v449
    %581 = vmatprep.subr.bf16.mxu0 0
    %582 = vmatpush1.bf16.msra.mxu0 %v450
    %583 = vmatprep.subr.bf16.mxu0 0
    %584 = vmatpush1.bf16.msra.mxu0 %v451
    %585 = vmatprep.subr.bf16.mxu0 0
    %586 = vmatpush1.bf16.msra.mxu0 %v452
    %587 = vmatprep.subr.bf16.mxu0 0
    %588 = vmatpush1.bf16.msra.mxu0 %v453
    %589 = vmatprep.subr.bf16.mxu0 0
    %590 = vmatpush1.bf16.msra.mxu0 %v454
    %591 = vmatprep.subr.bf16.mxu0 0
    %592 = vmatpush1.bf16.msra.mxu0 %v455
    %593 = vmatprep.subr.bf16.mxu0 0
    %594 = vmatpush1.bf16.msra.mxu0 %v456
    %595 = vmatprep.subr.bf16.mxu0 0
    %596 = vmatpush1.bf16.msra.mxu0 %v457
    %597 = vmatprep.subr.bf16.mxu0 0
    %598 = vmatpush1.bf16.msra.mxu0 %v458
    %599 = vmatprep.subr.bf16.mxu0 0
    %600 = vmatpush1.bf16.msra.mxu0 %v459
    %601 = vmatprep.subr.bf16.mxu0 0
    %602 = vmatpush1.bf16.msra.mxu0 %v460
    %603 = vmatprep.mubr.bf16.mxu0 %v124
    %604 = vmatmul.mubr.bf16.gmra.mrb[0].mxu0 %v123
    %v605 = vpop.f32.mrb[0].mxu0
    %v606 = vadd.f32 %v566, %v605
    %v607 = vpop.f32.mrb[0].mxu0
    %v608 = vpop.f32.mrb[0].mxu0
    %v609 = vpop.f32.mrb[0].mxu0
    %610 = vdwg.mxu0
    %611 = vmatprep.subr.bf16.mxu0 0
    %612 = vmatpush1.bf16.msra.mxu0 %v461
    %613 = vmatprep.subr.bf16.mxu0 0
    %614 = vmatpush1.bf16.msra.mxu0 %v462
    %615 = vmatprep.subr.bf16.mxu0 0
    %616 = vmatpush1.bf16.msra.mxu0 %v463
    %617 = vmatprep.subr.bf16.mxu0 0
    %618 = vmatpush1.bf16.msra.mxu0 %v464
    %619 = vmatprep.subr.bf16.mxu0 0
    %620 = vmatpush1.bf16.msra.mxu0 %v465
    %621 = vmatprep.subr.bf16.mxu0 0
    %622 = vmatpush1.bf16.msra.mxu0 %v466
    %623 = vmatprep.subr.bf16.mxu0 0
    %624 = vmatpush1.bf16.msra.mxu0 %v467
    %625 = vmatprep.subr.bf16.mxu0 0
    %626 = vmatpush1.bf16.msra.mxu0 %v468
    %627 = vmatprep.subr.bf16.mxu0 0
    %628 = vmatpush1.bf16.msra.mxu0 %v469
    %629 = vmatprep.subr.bf16.mxu0 0
    %630 = vmatpush1.bf16.msra.mxu0 %v470
    %631 = vmatprep.subr.bf16.mxu0 0
    %632 = vmatpush1.bf16.msra.mxu0 %v471
    %633 = vmatprep.subr.bf16.mxu0 0
    %634 = vmatpush1.bf16.msra.mxu0 %v472
    %635 = vmatprep.subr.bf16.mxu0 0
    %636 = vmatpush1.bf16.msra.mxu0 %v473
    %637 = vmatprep.subr.bf16.mxu0 0
    %638 = vmatpush1.bf16.msra.mxu0 %v474
    %639 = vmatprep.subr.bf16.mxu0 0
    %640 = vmatpush1.bf16.msra.mxu0 %v475
    %641 = vmatprep.subr.bf16.mxu0 0
    %642 = vmatpush1.bf16.msra.mxu0 %v476
    %643 = vmatprep.mubr.bf16.mxu0 %v126
    %644 = vmatmul.mubr.bf16.gmra.mrb[0].mxu0 %v125
    %v645 = vpop.f32.mrb[0].mxu0
    %v646 = vadd.f32 %v606, %v645
    %v647 = vpop.f32.mrb[0].mxu0
    %v648 = vpop.f32.mrb[0].mxu0
    %v649 = vpop.f32.mrb[0].mxu0
    %650 = vdwg.mxu0
    %651 = vmatprep.subr.bf16.mxu0 0
    %652 = vmatpush1.bf16.msra.mxu0 %v477
    %653 = vmatprep.subr.bf16.mxu0 0
    %654 = vmatpush1.bf16.msra.mxu0 0
    %655 = vmatprep.subr.bf16.mxu0 0
    %656 = vmatpush1.bf16.msra.mxu0 0
    %657 = vmatprep.subr.bf16.mxu0 0
    %658 = vmatpush1.bf16.msra.mxu0 0
    %659 = vmatprep.subr.bf16.mxu0 0
    %660 = vmatpush1.bf16.msra.mxu0 0
    %661 = vmatprep.subr.bf16.mxu0 0
    %662 = vmatpush1.bf16.msra.mxu0 0
    %663 = vmatprep.subr.bf16.mxu0 0
    %664 = vmatpush1.bf16.msra.mxu0 0
    %665 = vmatprep.subr.bf16.mxu0 0
    %666 = vmatpush1.bf16.msra.mxu0 0
    %667 = vmatprep.subr.bf16.mxu0 0
    %668 = vmatpush1.bf16.msra.mxu0 0
    %669 = vmatprep.subr.bf16.mxu0 0
    %670 = vmatpush1.bf16.msra.mxu0 0
    %671 = vmatprep.subr.bf16.mxu0 0
    %672 = vmatpush1.bf16.msra.mxu0 0
    %673 = vmatprep.subr.bf16.mxu0 0
    %674 = vmatpush1.bf16.msra.mxu0 0
    %675 = vmatprep.subr.bf16.mxu0 0
    %676 = vmatpush1.bf16.msra.mxu0 0
    %677 = vmatprep.subr.bf16.mxu0 0
    %678 = vmatpush1.bf16.msra.mxu0 0
    %679 = vmatprep.subr.bf16.mxu0 0
    %680 = vmatpush1.bf16.msra.mxu0 0
    %681 = vmatprep.subr.bf16.mxu0 0
    %682 = vmatpush1.bf16.msra.mxu0 0
    %683 = vmatprep.mubr.bf16.mxu0 0
    %684 = vmatmul.mubr.bf16.gmra.mrb[0].mxu0 %v529
    %v685 = vpop.f32.mrb[0].mxu0
    %v686 = vadd.f32 %v646, %v685
    %v687 = vpop.f32.mrb[0].mxu0
    %v688 = vpop.f32.mrb[0].mxu0
    %v689 = vpop.f32.mrb[0].mxu0
    %690 = vdwg.mxu0
    %v691 = vmax.f32 %v686, 0.0
    %v692 = vpack.c.bf16 %v691, %v691
    %v693 = vld [vmem:[#allocation5] sm:$0xf]
    %v694 = vld [vmem:[#allocation5 + $0x4] sm:$0xf]
    %v695 = vld [vmem:[#allocation5 + $0x8] sm:$0xf]
    %v696 = vld [vmem:[#allocation5 + $0xc] sm:$0xf]
    %v697 = vld [vmem:[#allocation5 + $0x10] sm:$0xf]
    %v698 = vld [vmem:[#allocation5 + $0x14] sm:$0xf]
    %v699 = vld [vmem:[#allocation5 + $0x18] sm:$0xf]
    %v700 = vld [vmem:[#allocation5 + $0x1c] sm:$0xf]
    %v701 = vld [vmem:[#allocation5 + $0x20] sm:$0xf]
    %v702 = vld [vmem:[#allocation5 + $0x24] sm:$0xf]
    %v703 = vld [vmem:[#allocation5 + $0x28] sm:$0xf]
    %v704 = vld [vmem:[#allocation5 + $0x2c] sm:$0xf]
    %v705 = vld [vmem:[#allocation5 + $0x30] sm:$0xf]
    %v706 = vld [vmem:[#allocation5 + $0x34] sm:$0xf]
    %v707 = vld [vmem:[#allocation5 + $0x38] sm:$0xf]
    %v708 = vld [vmem:[#allocation5 + $0x3c] sm:$0xf]
    %v709 = vld [vmem:[%s4] sm:$0x1]
    %v711 = vlaneseq
    %v712 = vshrl.u32 %v711, 7
    %v713 = vsub.s32 0, %v712
    %v714 = vrot.slane %v709, %v713
    %v732 = vunpack.c.l.b16 %v693
    %v733 = vunpack.c.l.b16 %v694
    %v734 = vunpack.c.l.b16 %v695
    %v735 = vunpack.c.l.b16 %v696
    %v736 = vunpack.c.l.b16 %v697
    %v737 = vunpack.c.l.b16 %v698
    %v738 = vunpack.c.l.b16 %v699
    %v739 = vunpack.c.l.b16 %v700
    %v740 = vunpack.c.l.b16 %v701
    %v741 = vunpack.c.l.b16 %v702
    %v742 = vunpack.c.l.b16 %v703
    %v743 = vunpack.c.l.b16 %v704
    %v744 = vunpack.c.l.b16 %v705
    %v745 = vunpack.c.l.b16 %v706
    %v746 = vunpack.c.l.b16 %v707
    %v747 = vunpack.c.l.b16 %v708
    %v748 = vpack.c.b16 %v733, %v732
    %v749 = vpack.c.b16 %v735, %v734
    %v750 = vpack.c.b16 %v737, %v736
    %v751 = vpack.c.b16 %v739, %v738
    %v752 = vpack.c.b16 %v741, %v740
    %v753 = vpack.c.b16 %v743, %v742
    %v754 = vpack.c.b16 %v745, %v744
    %v755 = vpack.c.b16 %v747, %v746
    %764 = vmatprep.subr.bf16.mxu0 0
    %765 = vmatpush1.bf16.msra.mxu0 %v748
    %766 = vmatprep.subr.bf16.mxu0 0
    %767 = vmatpush1.bf16.msra.mxu0 %v749
    %768 = vmatprep.subr.bf16.mxu0 0
    %769 = vmatpush1.bf16.msra.mxu0 %v750
    %770 = vmatprep.subr.bf16.mxu0 0
    %771 = vmatpush1.bf16.msra.mxu0 %v751
    %772 = vmatprep.subr.bf16.mxu0 0
    %773 = vmatpush1.bf16.msra.mxu0 %v752
    %774 = vmatprep.subr.bf16.mxu0 0
    %775 = vmatpush1.bf16.msra.mxu0 %v753
    %776 = vmatprep.subr.bf16.mxu0 0
    %777 = vmatpush1.bf16.msra.mxu0 %v754
    %778 = vmatprep.subr.bf16.mxu0 0
    %779 = vmatpush1.bf16.msra.mxu0 %v755
    %780 = vmatprep.subr.bf16.mxu0 0
    %781 = vmatpush1.bf16.msra.mxu0 0
    %782 = vmatprep.subr.bf16.mxu0 0
    %783 = vmatpush1.bf16.msra.mxu0 0
    %784 = vmatprep.subr.bf16.mxu0 0
    %785 = vmatpush1.bf16.msra.mxu0 0
    %786 = vmatprep.subr.bf16.mxu0 0
    %787 = vmatpush1.bf16.msra.mxu0 0
    %788 = vmatprep.subr.bf16.mxu0 0
    %789 = vmatpush1.bf16.msra.mxu0 0
    %790 = vmatprep.subr.bf16.mxu0 0
    %791 = vmatpush1.bf16.msra.mxu0 0
    %792 = vmatprep.subr.bf16.mxu0 0
    %793 = vmatpush1.bf16.msra.mxu0 0
    %794 = vmatprep.subr.bf16.mxu0 0
    %795 = vmatpush1.bf16.msra.mxu0 0
    %796 = vmatprep.mubr.bf16.mxu0 0
    %797 = vmatmul.mubr.bf16.gmra.mrb[0].mxu0 %v692
    %v798 = vpop.f32.mrb[0].mxu0
    %v799 = vadd.f32 %v714, %v798
    %v800 = vpop.f32.mrb[0].mxu0
    %v801 = vpop.f32.mrb[0].mxu0
    %v802 = vpop.f32.mrb[0].mxu0
    %803 = vdwg.mxu0
    %v804 = vmax.f32 %v799, 0.0
    %v805 = vpack.c.bf16 %v804, %v804
    %v806 = vld [vmem:[#allocation7] sm:$0xf]
    %v807 = vld [vmem:[#allocation7 + $0x4] sm:$0xf]
    %v808 = vld [vmem:[#allocation7 + $0x8] sm:$0xf]
    %v809 = vld [vmem:[#allocation7 + $0xc] sm:$0xf]
    %v810 = vld [vmem:[#allocation7 + $0x10] sm:$0xf]
    %v811 = vld [vmem:[#allocation7 + $0x14] sm:$0xf]
    %v812 = vld [vmem:[#allocation7 + $0x18] sm:$0xf]
    %v813 = vld [vmem:[#allocation7 + $0x1c] sm:$0xf]
    %v814 = vld [vmem:[#allocation7 + $0x20] sm:$0xf]
    %v815 = vld [vmem:[#allocation7 + $0x24] sm:$0xf]
    %v816 = vld [vmem:[#allocation7 + $0x28] sm:$0xf]
    %v817 = vld [vmem:[#allocation7 + $0x2c] sm:$0xf]
    %v818 = vld [vmem:[#allocation7 + $0x30] sm:$0xf]
    %v819 = vld [vmem:[#allocation7 + $0x34] sm:$0xf]
    %v820 = vld [vmem:[#allocation7 + $0x38] sm:$0xf]
    %v821 = vld [vmem:[#allocation7 + $0x3c] sm:$0xf]
    %v822 = vld [vmem:[%s6] sm:$0x1]
    %v824 = vlaneseq
    %v825 = vshrl.u32 %v824, 7
    %v826 = vsub.s32 0, %v825
    %v827 = vrot.slane %v822, %v826
    %v845 = vunpack.c.l.b16 %v806
    %v846 = vunpack.c.l.b16 %v807
    %v847 = vunpack.c.l.b16 %v808
    %v848 = vunpack.c.l.b16 %v809
    %v849 = vunpack.c.l.b16 %v810
    %v850 = vunpack.c.l.b16 %v811
    %v851 = vunpack.c.l.b16 %v812
    %v852 = vunpack.c.l.b16 %v813
    %v853 = vunpack.c.l.b16 %v814
    %v854 = vunpack.c.l.b16 %v815
    %v855 = vunpack.c.l.b16 %v816
    %v856 = vunpack.c.l.b16 %v817
    %v857 = vunpack.c.l.b16 %v818
    %v858 = vunpack.c.l.b16 %v819
    %v859 = vunpack.c.l.b16 %v820
    %v860 = vunpack.c.l.b16 %v821
    %v861 = vpack.c.b16 %v846, %v845
    %v862 = vpack.c.b16 %v848, %v847
    %v863 = vpack.c.b16 %v850, %v849
    %v864 = vpack.c.b16 %v852, %v851
    %v865 = vpack.c.b16 %v854, %v853
    %v866 = vpack.c.b16 %v856, %v855
    %v867 = vpack.c.b16 %v858, %v857
    %v868 = vpack.c.b16 %v860, %v859
    %877 = vmatprep.subr.bf16.mxu0 0
    %878 = vmatpush1.bf16.msra.mxu0 %v861
    %879 = vmatprep.subr.bf16.mxu0 0
    %880 = vmatpush1.bf16.msra.mxu0 %v862
    %881 = vmatprep.subr.bf16.mxu0 0
    %882 = vmatpush1.bf16.msra.mxu0 %v863
    %883 = vmatprep.subr.bf16.mxu0 0
    %884 = vmatpush1.bf16.msra.mxu0 %v864
    %885 = vmatprep.subr.bf16.mxu0 0
    %886 = vmatpush1.bf16.msra.mxu0 %v865
    %887 = vmatprep.subr.bf16.mxu0 0
    %888 = vmatpush1.bf16.msra.mxu0 %v866
    %889 = vmatprep.subr.bf16.mxu0 0
    %890 = vmatpush1.bf16.msra.mxu0 %v867
    %891 = vmatprep.subr.bf16.mxu0 0
    %892 = vmatpush1.bf16.msra.mxu0 %v868
    %893 = vmatprep.subr.bf16.mxu0 0
    %894 = vmatpush1.bf16.msra.mxu0 0
    %895 = vmatprep.subr.bf16.mxu0 0
    %896 = vmatpush1.bf16.msra.mxu0 0
    %897 = vmatprep.subr.bf16.mxu0 0
    %898 = vmatpush1.bf16.msra.mxu0 0
    %899 = vmatprep.subr.bf16.mxu0 0
    %900 = vmatpush1.bf16.msra.mxu0 0
    %901 = vmatprep.subr.bf16.mxu0 0
    %902 = vmatpush1.bf16.msra.mxu0 0
    %903 = vmatprep.subr.bf16.mxu0 0
    %904 = vmatpush1.bf16.msra.mxu0 0
    %905 = vmatprep.subr.bf16.mxu0 0
    %906 = vmatpush1.bf16.msra.mxu0 0
    %907 = vmatprep.subr.bf16.mxu0 0
    %908 = vmatpush1.bf16.msra.mxu0 0
    %909 = vmatprep.mubr.bf16.mxu0 0
    %910 = vmatmul.mubr.bf16.gmra.mrb[0].mxu0 %v805
    %v911 = vpop.f32.mrb[0].mxu0
    %v912 = vadd.f32 %v827, %v911
    %v913 = vpop.f32.mrb[0].mxu0
    %v914 = vpop.f32.mrb[0].mxu0
    %v915 = vpop.f32.mrb[0].mxu0
    %916 = vdwg.mxu0
    %v917 = vmax.f32 %v912, 0.0
    %v918 = vpack.c.bf16 %v917, %v917
    %v919 = vld [vmem:[#allocation8] sm:$0xf]
    %v920 = vld [vmem:[#allocation8 + $0x4] sm:$0xf]
    %v921 = vld [vmem:[#allocation8 + $0x8] sm:$0xf]
    %v922 = vld [vmem:[#allocation8 + $0xc] sm:$0xf]
    %v923 = vld [vmem:[#allocation8 + $0x10] sm:$0xf]
    %v924 = vld [vmem:[#allocation8 + $0x14] sm:$0xf]
    %v925 = vld [vmem:[#allocation8 + $0x18] sm:$0xf]
    %v926 = vld [vmem:[#allocation8 + $0x1c] sm:$0xf]
    %v927 = vld [vmem:[#allocation8 + $0x20] sm:$0xf]
    %v928 = vld [vmem:[#allocation8 + $0x24] sm:$0xf]
    %v929 = vld [vmem:[#allocation8 + $0x28] sm:$0xf]
    %v930 = vld [vmem:[#allocation8 + $0x2c] sm:$0xf]
    %v931 = vld [vmem:[#allocation8 + $0x30] sm:$0xf]
    %v932 = vld [vmem:[#allocation8 + $0x34] sm:$0xf]
    %v933 = vld [vmem:[#allocation8 + $0x38] sm:$0xf]
    %v934 = vld [vmem:[#allocation8 + $0x3c] sm:$0xf]
    %v935 = vld [vmem:[%s8] sm:$0x1]
    %v937 = vlaneseq
    %v938 = vshrl.u32 %v937, 7
    %v939 = vsub.s32 0, %v938
    %v940 = vrot.slane %v935, %v939
    %v958 = vunpack.c.l.b16 %v919
    %v959 = vunpack.c.l.b16 %v920
    %v960 = vunpack.c.l.b16 %v921
    %v961 = vunpack.c.l.b16 %v922
    %v962 = vunpack.c.l.b16 %v923
    %v963 = vunpack.c.l.b16 %v924
    %v964 = vunpack.c.l.b16 %v925
    %v965 = vunpack.c.l.b16 %v926
    %v966 = vunpack.c.l.b16 %v927
    %v967 = vunpack.c.l.b16 %v928
    %v968 = vunpack.c.l.b16 %v929
    %v969 = vunpack.c.l.b16 %v930
    %v970 = vunpack.c.l.b16 %v931
    %v971 = vunpack.c.l.b16 %v932
    %v972 = vunpack.c.l.b16 %v933
    %v973 = vunpack.c.l.b16 %v934
    %v974 = vpack.c.b16 %v959, %v958
    %v975 = vpack.c.b16 %v961, %v960
    %v976 = vpack.c.b16 %v963, %v962
    %v977 = vpack.c.b16 %v965, %v964
    %v978 = vpack.c.b16 %v967, %v966
    %v979 = vpack.c.b16 %v969, %v968
    %v980 = vpack.c.b16 %v971, %v970
    %v981 = vpack.c.b16 %v973, %v972
    %990 = vmatprep.subr.bf16.mxu0 0
    %991 = vmatpush1.bf16.msra.mxu0 %v974
    %992 = vmatprep.subr.bf16.mxu0 0
    %993 = vmatpush1.bf16.msra.mxu0 %v975
    %994 = vmatprep.subr.bf16.mxu0 0
    %995 = vmatpush1.bf16.msra.mxu0 %v976
    %996 = vmatprep.subr.bf16.mxu0 0
    %997 = vmatpush1.bf16.msra.mxu0 %v977
    %998 = vmatprep.subr.bf16.mxu0 0
    %999 = vmatpush1.bf16.msra.mxu0 %v978
    %1000 = vmatprep.subr.bf16.mxu0 0
    %1001 = vmatpush1.bf16.msra.mxu0 %v979
    %1002 = vmatprep.subr.bf16.mxu0 0
    %1003 = vmatpush1.bf16.msra.mxu0 %v980
    %1004 = vmatprep.subr.bf16.mxu0 0
    %1005 = vmatpush1.bf16.msra.mxu0 %v981
    %1006 = vmatprep.subr.bf16.mxu0 0
    %1007 = vmatpush1.bf16.msra.mxu0 0
    %1008 = vmatprep.subr.bf16.mxu0 0
    %1009 = vmatpush1.bf16.msra.mxu0 0
    %1010 = vmatprep.subr.bf16.mxu0 0
    %1011 = vmatpush1.bf16.msra.mxu0 0
    %1012 = vmatprep.subr.bf16.mxu0 0
    %1013 = vmatpush1.bf16.msra.mxu0 0
    %1014 = vmatprep.subr.bf16.mxu0 0
    %1015 = vmatpush1.bf16.msra.mxu0 0
    %1016 = vmatprep.subr.bf16.mxu0 0
    %1017 = vmatpush1.bf16.msra.mxu0 0
    %1018 = vmatprep.subr.bf16.mxu0 0
    %1019 = vmatpush1.bf16.msra.mxu0 0
    %1020 = vmatprep.subr.bf16.mxu0 0
    %1021 = vmatpush1.bf16.msra.mxu0 0
    %1022 = vmatprep.mubr.bf16.mxu0 0
    %1023 = vmatmul.mubr.bf16.gmra.mrb[0].mxu0 %v918
    %v1024 = vpop.f32.mrb[0].mxu0
    %v1025 = vadd.f32 %v940, %v1024
    %v1026 = vpop.f32.mrb[0].mxu0
    %v1027 = vpop.f32.mrb[0].mxu0
    %v1028 = vpop.f32.mrb[0].mxu0
    %1029 = vdwg.mxu0
    %v1030 = vmax.f32 %v1025, 0.0
    %v1031 = vpack.c.bf16 %v1030, %v1030
    %v1032 = vld [vmem:[#allocation10] sm:$0xf]
    %v1033 = vld [vmem:[#allocation10 + $0x4] sm:$0xf]
    %v1034 = vld [vmem:[#allocation10 + $0x8] sm:$0xf]
    %v1035 = vld [vmem:[#allocation10 + $0xc] sm:$0xf]
    %v1036 = vld [vmem:[#allocation10 + $0x10] sm:$0xf]
    %v1037 = vld [vmem:[#allocation10 + $0x14] sm:$0xf]
    %v1038 = vld [vmem:[#allocation10 + $0x18] sm:$0xf]
    %v1039 = vld [vmem:[#allocation10 + $0x1c] sm:$0xf]
    %v1040 = vld [vmem:[#allocation10 + $0x20] sm:$0xf]
    %v1041 = vld [vmem:[#allocation10 + $0x24] sm:$0xf]
    %v1042 = vld [vmem:[#allocation10 + $0x28] sm:$0xf]
    %v1043 = vld [vmem:[#allocation10 + $0x2c] sm:$0xf]
    %v1044 = vld [vmem:[#allocation10 + $0x30] sm:$0xf]
    %v1045 = vld [vmem:[#allocation10 + $0x34] sm:$0xf]
    %v1046 = vld [vmem:[#allocation10 + $0x38] sm:$0xf]
    %v1047 = vld [vmem:[#allocation10 + $0x3c] sm:$0xf]
    %v1048 = vld [vmem:[%s10] sm:$0x1]
    %v1050 = vlaneseq
    %v1051 = vshrl.u32 %v1050, 7
    %v1052 = vsub.s32 0, %v1051
    %v1053 = vrot.slane %v1048, %v1052
    %v1071 = vunpack.c.l.b16 %v1032
    %v1072 = vunpack.c.l.b16 %v1033
    %v1073 = vunpack.c.l.b16 %v1034
    %v1074 = vunpack.c.l.b16 %v1035
    %v1075 = vunpack.c.l.b16 %v1036
    %v1076 = vunpack.c.l.b16 %v1037
    %v1077 = vunpack.c.l.b16 %v1038
    %v1078 = vunpack.c.l.b16 %v1039
    %v1079 = vunpack.c.l.b16 %v1040
    %v1080 = vunpack.c.l.b16 %v1041
    %v1081 = vunpack.c.l.b16 %v1042
    %v1082 = vunpack.c.l.b16 %v1043
    %v1083 = vunpack.c.l.b16 %v1044
    %v1084 = vunpack.c.l.b16 %v1045
    %v1085 = vunpack.c.l.b16 %v1046
    %v1086 = vunpack.c.l.b16 %v1047
    %v1087 = vpack.c.b16 %v1072, %v1071
    %v1088 = vpack.c.b16 %v1074, %v1073
    %v1089 = vpack.c.b16 %v1076, %v1075
    %v1090 = vpack.c.b16 %v1078, %v1077
    %v1091 = vpack.c.b16 %v1080, %v1079
    %v1092 = vpack.c.b16 %v1082, %v1081
    %v1093 = vpack.c.b16 %v1084, %v1083
    %v1094 = vpack.c.b16 %v1086, %v1085
    %1103 = vmatprep.subr.bf16.mxu0 0
    %1104 = vmatpush1.bf16.msra.mxu0 %v1087
    %1105 = vmatprep.subr.bf16.mxu0 0
    %1106 = vmatpush1.bf16.msra.mxu0 %v1088
    %1107 = vmatprep.subr.bf16.mxu0 0
    %1108 = vmatpush1.bf16.msra.mxu0 %v1089
    %1109 = vmatprep.subr.bf16.mxu0 0
    %1110 = vmatpush1.bf16.msra.mxu0 %v1090
    %1111 = vmatprep.subr.bf16.mxu0 0
    %1112 = vmatpush1.bf16.msra.mxu0 %v1091
    %1113 = vmatprep.subr.bf16.mxu0 0
    %1114 = vmatpush1.bf16.msra.mxu0 %v1092
    %1115 = vmatprep.subr.bf16.mxu0 0
    %1116 = vmatpush1.bf16.msra.mxu0 %v1093
    %1117 = vmatprep.subr.bf16.mxu0 0
    %1118 = vmatpush1.bf16.msra.mxu0 %v1094
    %1119 = vmatprep.subr.bf16.mxu0 0
    %1120 = vmatpush1.bf16.msra.mxu0 0
    %1121 = vmatprep.subr.bf16.mxu0 0
    %1122 = vmatpush1.bf16.msra.mxu0 0
    %1123 = vmatprep.subr.bf16.mxu0 0
    %1124 = vmatpush1.bf16.msra.mxu0 0
    %1125 = vmatprep.subr.bf16.mxu0 0
    %1126 = vmatpush1.bf16.msra.mxu0 0
    %1127 = vmatprep.subr.bf16.mxu0 0
    %1128 = vmatpush1.bf16.msra.mxu0 0
    %1129 = vmatprep.subr.bf16.mxu0 0
    %1130 = vmatpush1.bf16.msra.mxu0 0
    %1131 = vmatprep.subr.bf16.mxu0 0
    %1132 = vmatpush1.bf16.msra.mxu0 0
    %1133 = vmatprep.subr.bf16.mxu0 0
    %1134 = vmatpush1.bf16.msra.mxu0 0
    %1135 = vmatprep.mubr.bf16.mxu0 0
    %1136 = vmatmul.mubr.bf16.gmra.mrb[0].mxu0 %v1031
    %v1137 = vpop.f32.mrb[0].mxu0
    %v1138 = vadd.f32 %v1053, %v1137
    %v1139 = vpop.f32.mrb[0].mxu0
    %v1140 = vpop.f32.mrb[0].mxu0
    %v1141 = vpop.f32.mrb[0].mxu0
    %1142 = vdwg.mxu0
    %1143 = vst [vmem:[#allocation11] sm:$0xf] %v1138
    // Predicated region
    $region66: #{feedforward_neural_network_forward.1} parent=1 // pred_check
      _
    $region67: #{feedforward_neural_network_forward.1} parent=1 // pred_check_branch
      %1145 = sbr.rel (0) target = $region69
    $region68: #{feedforward_neural_network_forward.1} parent=1 // pred_region
      %s1147 = ssub.s32 64, 64
      %1148 = vsyncadd [#allocation4], %s1147
      %s1150 = sshll.u32 [#allocation11], 4
      %s1151 = int_to_ptr.vmem [resolvable:$true] %s1150
      %1153 = dma.vmem_to_hbm [thread:$0]  %s1151, 64, %s11, [#allocation4]
    $region69: #{feedforward_neural_network_forward.1} parent=1 // pred_fallthru
      _
    // Predicated region
    $region70: #{feedforward_neural_network_forward.1} parent=1 // pred_check
      _
    $region71: #{feedforward_neural_network_forward.1} parent=1 // pred_check_branch
      %1155 = sbr.rel (0) target = $region73
    $region72: #{feedforward_neural_network_forward.1} parent=1 // pred_region
      %1156 = dma.done [#allocation4], 64
    $region73: #{feedforward_neural_network_forward.1} parent=1 // pred_fallthru
      _
    %1157 = vsyncpa [#allocation3], 1
    %1158 = vsyncpa [#allocation6], 1
    %1159 = vsyncpa [#allocation9], 1
    %1160 = vsyncpa [#allocation4], 1

</llo_original>
